<compile_context>
chip_gen: v7x
topology: tpu7x:2x2x1
jax: 0.10.0
libtpu: 0.0.40
codegen_flags: <defaults>
</compile_context>

<pallas_src>
import functools

import jax
import jax.numpy as jnp
from jax.experimental import pallas as pl
from jax.experimental.pallas import tpu as pltpu

LANE = 128
SUBLANE_BF16 = 16  # bf16 packs 16 rows per vreg sublane group


def _round_up(x, m):
    return (x + m - 1) // m * m


def _ode_rhs_kernel(x_ref, w_ref, o_ref, *, compute_dtype):
    # One batch tile per grid step: [tile_b, insize] @ [insize, n_pad] on the
    # MXU, f32 accumulation, lane-dense (128-multiple) store.
    # The f32 -> bf16 cast of x happens here (VPU, hidden under MXU/DMA slack)
    # instead of a separate wrapper astype that would add a full HBM pass.
    x = x_ref[...].astype(compute_dtype)
    o_ref[...] = jnp.dot(
        x, w_ref[...], preferred_element_type=jnp.float32
    ).astype(o_ref.dtype)


def ode_system_forward(x, W, *, tile_b=None, use_bf16=True, out_dtype=None,
                       return_padded=False):
    """Pallas equivalent of ODESystem.forward for the linear ode_equations.

    x : [batch, insize] float32
    W : [insize, outsize] float32 (= concat([A^T, B^T], axis=0))
    returns [batch, outsize] (or [batch, n_pad] if return_padded=True)
    """
    assert x.ndim == 2, "ODESystem.forward expects a 2-D input"
    batch, insize = x.shape
    insize_w, outsize = W.shape
    assert insize == insize_w

    # ---- lane-dense output: fold zero-padding of N into W (done once) ------
    n_pad = _round_up(outsize, LANE)
    W_p = jnp.pad(W, ((0, 0), (0, n_pad - outsize))) if n_pad != outsize else W

    compute_dtype = jnp.bfloat16 if use_bf16 else x.dtype
    W_c = W_p.astype(compute_dtype)          # W is tiny; one-time wrapper cast
    out_dtype = x.dtype if out_dtype is None else jnp.dtype(out_dtype)

    # ---- batch tiling -------------------------------------------------------
    # Default: one tile covering the whole batch (grid=(1,)). Only split when
    # the matmul is big enough that per-tile work dwarfs the ~0.35 us per-step
    # overhead; then use an even tile count so both v7x TensorCores get work.
    if tile_b is None:
        total_flops = 2 * batch * insize * n_pad
        if total_flops >= (1 << 28) and batch >= 2 * SUBLANE_BF16:
            tile_b = _round_up(pl.cdiv(batch, 2), SUBLANE_BF16)
        else:
            tile_b = batch
    tile_b = min(tile_b, batch)
    if tile_b < batch:
        tile_b = max(SUBLANE_BF16, (tile_b // SUBLANE_BF16) * SUBLANE_BF16)
    grid_b = pl.cdiv(batch, tile_b)

    # ---- VMEM budget: double-buffered x/out tiles + single-buffered W ------
    x_tile_bytes = tile_b * insize * x.dtype.itemsize
    out_tile_bytes = tile_b * n_pad * out_dtype.itemsize
    w_bytes = W_c.size * W_c.dtype.itemsize
    working_set = 2 * (x_tile_bytes + out_tile_bytes) + w_bytes
    # 2x headroom, floor 8 MiB, cap 32 MiB (safe on v7x's 64 MiB physical VMEM).
    vmem_limit = int(min(max(2 * working_set, 8 << 20), 32 << 20))

    flops = 2 * batch * insize * n_pad
    bytes_accessed = (
        x.size * x.dtype.itemsize + w_bytes + batch * n_pad * out_dtype.itemsize
    )

    kernel = functools.partial(_ode_rhs_kernel, compute_dtype=compute_dtype)

    out_padded = pl.pallas_call(
        kernel,
        out_shape=jax.ShapeDtypeStruct((batch, n_pad), out_dtype),
        grid=(grid_b,),
        in_specs=[
            # x streams through double buffers as f32 (cast happens in-kernel).
            pl.BlockSpec((tile_b, insize), lambda i: (i, 0)),
            # Constant index_map -> W is DMA'd once and stays resident for all
            # batch tiles; Buffered(1) avoids a useless second copy of W.
            pl.BlockSpec((insize, n_pad), lambda i: (0, 0),
                         pipeline_mode=pl.Buffered(1)),
        ],
        out_specs=pl.BlockSpec((tile_b, n_pad), lambda i: (i, 0)),
        compiler_params=pltpu.CompilerParams(
            # batch tiles are independent -> shard across TCs when grid_b >= 2
            dimension_semantics=("parallel",),
            vmem_limit_bytes=vmem_limit,
        ),
        cost_estimate=pl.CostEstimate(
            flops=flops, transcendentals=0, bytes_accessed=bytes_accessed
        ),
    )(x, W_c)

    if return_padded or n_pad == outsize:
        return out_padded
    # TODO(synk): fuse the consumer (e.g. x_next = x + h * f) into the kernel
    # so this slice never materializes; under jit it fuses into the consumer.
    return out_padded[:, :outsize]


if __name__ == "__main__":
    # Module hyperparameters (2-D [batch, insize] input, insize = nx + nu)
    batch = 256
    outsize = 32            # nx (state dim)
    insize = 48             # nx + nu  -> nu = 16 exogenous inputs
    nx = outsize
    nu = insize - outsize

    key = jax.random.PRNGKey(0)
    kx, kA, kB = jax.random.split(key, 3)

    # Deterministic synthetic parameters: A [nx, nx], B [nx, nu]
    A = jax.random.normal(kA, (nx, nx), dtype=jnp.float32) * 0.1
    B = jax.random.normal(kB, (nx, nu), dtype=jnp.float32) * 0.1
    # Fused weight so that out = x @ W == x_state @ A^T + u @ B^T
    W = jnp.concatenate([A.T, B.T], axis=0)          # [insize, outsize]

    x = jax.random.normal(kx, (batch, insize), dtype=jnp.float32)

    # Default tiling -> grid=(1,): the whole (tiny) batch in one step, with W
    # single-buffered and resident; f32->bf16 cast of x happens in-kernel.
    out = ode_system_forward(x, W, use_bf16=True)
    out = jax.block_until_ready(out)

    # Reference check: same bf16-rounded operands, f32 accumulation.
    x_bf = x.astype(jnp.bfloat16).astype(jnp.float32)
    A_bf = A.astype(jnp.bfloat16).astype(jnp.float32)
    B_bf = B.astype(jnp.bfloat16).astype(jnp.float32)
    ref = x_bf[:, :nx] @ A_bf.T + x_bf[:, nx:] @ B_bf.T

    assert out.shape == (batch, outsize)
    assert out.dtype == jnp.float32
    assert jnp.allclose(out, ref, atol=2e-3, rtol=2e-3), "mismatch vs reference"

    print("KERNEL_OK")
</pallas_src>

<mosaic_0001>
module attributes {stable_mosaic.version = 11 : i64} {
  func.func @_ode_rhs_kernel(%arg0: i32, %arg1: memref<256x48xf32, #tpu.memory_space<vmem>>, %arg2: memref<48x128xbf16, #tpu.memory_space<vmem>>, %arg3: memref<256x128xf32, #tpu.memory_space<vmem>>) attributes {dimension_semantics = [#tpu.dimension_semantics<parallel>], iteration_bounds = array<i64: 1>, scalar_prefetch = 0 : i64, scratch_operands = 0 : i64, tpu.core_type = #tpu.core_type<tc>, window_params = [{transform_indices = @transform_0, window_bounds = array<i64: 256, 48>}, {pipeline_mode = #tpu.pipeline_mode<synchronous>, transform_indices = @transform_1, window_bounds = array<i64: 48, 128>}, {transform_indices = @transform_2, window_bounds = array<i64: 256, 128>}]} {
    %c0 = arith.constant 0 : index
    %c0_0 = arith.constant 0 : index
    %0 = vector.load %arg1[%c0, %c0_0] : memref<256x48xf32, #tpu.memory_space<vmem>>, vector<256x48xf32>
    %1 = arith.truncf %0 : vector<256x48xf32> to vector<256x48xbf16>
    %c0_1 = arith.constant 0 : index
    %c0_2 = arith.constant 0 : index
    %2 = vector.load %arg2[%c0_1, %c0_2] : memref<48x128xbf16, #tpu.memory_space<vmem>>, vector<48x128xbf16>
    %cst = arith.constant dense<0.000000e+00> : vector<256x128xf32>
    %3 = tpu.matmul %1, %2, %cst {dimension_numbers = #tpu.dot_dimension_numbers<[1], [0], [0], [1], [0, 0, 1, 1], [], []>} : vector<256x48xbf16>, vector<48x128xbf16>, vector<256x128xf32> -> vector<256x128xf32>
    %c0_3 = arith.constant 0 : index
    %c0_4 = arith.constant 0 : index
    %4 = vector.load %arg3[%c0_3, %c0_4] : memref<256x128xf32, #tpu.memory_space<vmem>>, vector<256x128xf32>
    tpu.vector_store %arg3[%c0_3, %c0_4], %3 {strides = array<i32>} : memref<256x128xf32, #tpu.memory_space<vmem>>, vector<256x128xf32>,
    return
  }
  func.func @transform_0(%arg0: i32) -> (i32, i32) {
    %c0_i32 = arith.constant 0 : i32
    %c0_i32_0 = arith.constant 0 : i32
    return %arg0, %c0_i32 : i32, i32
  }
  func.func @transform_1(%arg0: i32) -> (i32, i32) {
    %c0_i32 = arith.constant 0 : i32
    %c0_i32_0 = arith.constant 0 : i32
    %c0_i32_1 = arith.constant 0 : i32
    return %c0_i32, %c0_i32_0 : i32, i32
  }
  func.func @transform_2(%arg0: i32) -> (i32, i32) {
    %c0_i32 = arith.constant 0 : i32
    %c0_i32_0 = arith.constant 0 : i32
    return %arg0, %c0_i32 : i32, i32
  }
}

</mosaic_0001>

<llo_original>
// kernel: tpu_custom_call.1
$region0: #{tpu_custom_call.1}
  #allocation0 [shape = 'u32[]', space=smem, size = 0x4, offset = 0x4, fixed_abs, tag = 'smem constant byte address 0x4 - core index']
  #allocation1 [shape = 'u32[144,128]{1,0:T(1,128)}', space=vmem, size = 0x12000, scoped, tag = 'internal scratch']
  %s0 = inlined_call_operand.vmem [shape: f32[256,48], index: 0, kind: input, shape index: {}]
  %s1 = inlined_call_operand.vmem [shape: bf16[48,128], index: 1, kind: input, shape index: {}]
  %s2 = inlined_call_operand.hbm [shape: f32[256,128], index: 2, kind: output, shape index: {}]
  %s3 = sld [smem:[#allocation0]]
  $region18: #{tpu_custom_call.1} parent=0
    _
  %s5 = ssub.s32 1, %s3
  %s6 = scalar_select 0, %s5, %s3
  $region1: #{tpu_custom_call.1} parent=0
    #allocation2 [shape = 'u8[131072]{0}', space=vmem, size = 0x20000, scoped, tag = 'output window, operand 0, single buffered']
    #allocation3 [shape = 's32[1]{0}', space=sflag, size = 0x4, scoped, tag = 'scoped memory for tpu_custom_call.1']
    %7 = vsyncpa [#allocation3], 0
    // Predicated region
    $region2: #{tpu_custom_call.1} parent=1 // pred_check
      _
    $region3: #{tpu_custom_call.1} parent=1 // pred_check_branch
      %9 = sbr.rel (0) target = $region5
    $region4: #{tpu_custom_call.1} parent=1 // pred_region
      _
    $region5: #{tpu_custom_call.1} parent=1 // pred_fallthru
      _
    // Predicated region
    $region6: #{tpu_custom_call.1} parent=1 // pred_check
      _
    $region7: #{tpu_custom_call.1} parent=1 // pred_check_branch
      %11 = sbr.rel (0) target = $region9
    $region8: #{tpu_custom_call.1} parent=1 // pred_region
      _
    $region9: #{tpu_custom_call.1} parent=1 // pred_fallthru
      _
    %v13 = vld [vmem:[%s0] sm:$0xff]
    %v14 = vld [vmem:[%s0 + $0x8] sm:$0xff]
    %v15 = vld [vmem:[%s0 + $0x10] sm:$0xff]
    %v16 = vld [vmem:[%s0 + $0x18] sm:$0xff]
    %v17 = vld [vmem:[%s0 + $0x20] sm:$0xff]
    %v18 = vld [vmem:[%s0 + $0x28] sm:$0xff]
    %v19 = vld [vmem:[%s0 + $0x30] sm:$0xff]
    %v20 = vld [vmem:[%s0 + $0x38] sm:$0xff]
    %v21 = vld [vmem:[%s0 + $0x40] sm:$0xff]
    %v22 = vld [vmem:[%s0 + $0x48] sm:$0xff]
    %v23 = vld [vmem:[%s0 + $0x50] sm:$0xff]
    %v24 = vld [vmem:[%s0 + $0x58] sm:$0xff]
    %v25 = vld [vmem:[%s0 + $0x60] sm:$0xff]
    %v26 = vld [vmem:[%s0 + $0x68] sm:$0xff]
    %v27 = vld [vmem:[%s0 + $0x70] sm:$0xff]
    %v28 = vld [vmem:[%s0 + $0x78] sm:$0xff]
    %v29 = vld [vmem:[%s0 + $0x80] sm:$0xff]
    %v30 = vld [vmem:[%s0 + $0x88] sm:$0xff]
    %v31 = vld [vmem:[%s0 + $0x90] sm:$0xff]
    %v32 = vld [vmem:[%s0 + $0x98] sm:$0xff]
    %v33 = vld [vmem:[%s0 + $0xa0] sm:$0xff]
    %v34 = vld [vmem:[%s0 + $0xa8] sm:$0xff]
    %v35 = vld [vmem:[%s0 + $0xb0] sm:$0xff]
    %v36 = vld [vmem:[%s0 + $0xb8] sm:$0xff]
    %v37 = vld [vmem:[%s0 + $0xc0] sm:$0xff]
    %v38 = vld [vmem:[%s0 + $0xc8] sm:$0xff]
    %v39 = vld [vmem:[%s0 + $0xd0] sm:$0xff]
    %v40 = vld [vmem:[%s0 + $0xd8] sm:$0xff]
    %v41 = vld [vmem:[%s0 + $0xe0] sm:$0xff]
    %v42 = vld [vmem:[%s0 + $0xe8] sm:$0xff]
    %v43 = vld [vmem:[%s0 + $0xf0] sm:$0xff]
    %v44 = vld [vmem:[%s0 + $0xf8] sm:$0xff]
    %v45 = vpack.c.bf16 %v14, %v13
    %v46 = vpack.c.bf16 %v16, %v15
    %v47 = vpack.c.bf16 %v18, %v17
    %v48 = vpack.c.bf16 %v20, %v19
    %v49 = vpack.c.bf16 %v22, %v21
    %v50 = vpack.c.bf16 %v24, %v23
    %v51 = vpack.c.bf16 %v26, %v25
    %v52 = vpack.c.bf16 %v28, %v27
    %v53 = vpack.c.bf16 %v30, %v29
    %v54 = vpack.c.bf16 %v32, %v31
    %v55 = vpack.c.bf16 %v34, %v33
    %v56 = vpack.c.bf16 %v36, %v35
    %v57 = vpack.c.bf16 %v38, %v37
    %v58 = vpack.c.bf16 %v40, %v39
    %v59 = vpack.c.bf16 %v42, %v41
    %v60 = vpack.c.bf16 %v44, %v43
    %v61 = vld [vmem:[%s1] sm:$0xf]
    %v62 = vld [vmem:[%s1 + $0x4] sm:$0xf]
    %v63 = vld [vmem:[%s1 + $0x8] sm:$0xf]
    %v64 = vld [vmem:[%s1 + $0xc] sm:$0xf]
    %v65 = vld [vmem:[%s1 + $0x10] sm:$0xf]
    %v66 = vld [vmem:[%s1 + $0x14] sm:$0xf]
    %v73 = vunpack.c.l.b16 %v61
    %v74 = vunpack.c.l.b16 %v62
    %v75 = vunpack.c.l.b16 %v63
    %v76 = vunpack.c.l.b16 %v64
    %v77 = vunpack.c.l.b16 %v65
    %v78 = vunpack.c.l.b16 %v66
    %v79 = vpack.c.b16 %v74, %v73
    %v80 = vpack.c.b16 %v76, %v75
    %v81 = vpack.c.b16 %v78, %v77
    %vm85 = vcmask 392192
    %v87 = vsel %vm85, %v45, 0
    %v90 = vsel %vm85, %v46, 0
    %v93 = vsel %vm85, %v47, 0
    %v96 = vsel %vm85, %v48, 0
    %v99 = vsel %vm85, %v49, 0
    %v102 = vsel %vm85, %v50, 0
    %v105 = vsel %vm85, %v51, 0
    %v108 = vsel %vm85, %v52, 0
    %v111 = vsel %vm85, %v53, 0
    %v114 = vsel %vm85, %v54, 0
    %v117 = vsel %vm85, %v55, 0
    %v120 = vsel %vm85, %v56, 0
    %v123 = vsel %vm85, %v57, 0
    %v126 = vsel %vm85, %v58, 0
    %v129 = vsel %vm85, %v59, 0
    %v132 = vsel %vm85, %v60, 0
    %134 = vmatprep.subr.bf16.mxu0 0
    %135 = vmatpush1.bf16.msra.mxu0 %v79
    %136 = vmatprep.subr.bf16.mxu0 0
    %137 = vmatpush1.bf16.msra.mxu0 %v80
    %138 = vmatprep.subr.bf16.mxu0 0
    %139 = vmatpush1.bf16.msra.mxu0 %v81
    %140 = vmatprep.subr.bf16.mxu0 0
    %141 = vmatpush1.bf16.msra.mxu0 0
    %142 = vmatprep.subr.bf16.mxu0 0
    %143 = vmatpush1.bf16.msra.mxu0 0
    %144 = vmatprep.subr.bf16.mxu0 0
    %145 = vmatpush1.bf16.msra.mxu0 0
    %146 = vmatprep.subr.bf16.mxu0 0
    %147 = vmatpush1.bf16.msra.mxu0 0
    %148 = vmatprep.subr.bf16.mxu0 0
    %149 = vmatpush1.bf16.msra.mxu0 0
    %150 = vmatprep.subr.bf16.mxu0 0
    %151 = vmatpush1.bf16.msra.mxu0 0
    %152 = vmatprep.subr.bf16.mxu0 0
    %153 = vmatpush1.bf16.msra.mxu0 0
    %154 = vmatprep.subr.bf16.mxu0 0
    %155 = vmatpush1.bf16.msra.mxu0 0
    %156 = vmatprep.subr.bf16.mxu0 0
    %157 = vmatpush1.bf16.msra.mxu0 0
    %158 = vmatprep.subr.bf16.mxu0 0
    %159 = vmatpush1.bf16.msra.mxu0 0
    %160 = vmatprep.subr.bf16.mxu0 0
    %161 = vmatpush1.bf16.msra.mxu0 0
    %162 = vmatprep.subr.bf16.mxu0 0
    %163 = vmatpush1.bf16.msra.mxu0 0
    %164 = vmatprep.subr.bf16.mxu0 0
    %165 = vmatpush1.bf16.msra.mxu0 0
    %166 = vmatprep.mubr.bf16.mxu0 0
    %167 = vmatmul.mubr.bf16.gmra.mrb[0].mxu0 %v87
    %v168 = vpop.f32.mrb[0].mxu0
    %v169 = vadd.f32 0.0, %v168
    %v170 = vpop.f32.mrb[0].mxu0
    %v171 = vpop.f32.mrb[0].mxu0
    %v172 = vadd.f32 0.0, %v171
    %v173 = vpop.f32.mrb[0].mxu0
    %174 = vmatprep.mubr.bf16.mxu0 0
    %175 = vmatmul.mubr.bf16.gmra.mrb[0].mxu0 %v90
    %v176 = vpop.f32.mrb[0].mxu0
    %v177 = vadd.f32 0.0, %v176
    %v178 = vpop.f32.mrb[0].mxu0
    %v179 = vpop.f32.mrb[0].mxu0
    %v180 = vadd.f32 0.0, %v179
    %v181 = vpop.f32.mrb[0].mxu0
    %182 = vmatprep.mubr.bf16.mxu0 0
    %183 = vmatmul.mubr.bf16.gmra.mrb[0].mxu0 %v93
    %v184 = vpop.f32.mrb[0].mxu0
    %v185 = vadd.f32 0.0, %v184
    %v186 = vpop.f32.mrb[0].mxu0
    %v187 = vpop.f32.mrb[0].mxu0
    %v188 = vadd.f32 0.0, %v187
    %v189 = vpop.f32.mrb[0].mxu0
    %190 = vmatprep.mubr.bf16.mxu0 0
    %191 = vmatmul.mubr.bf16.gmra.mrb[0].mxu0 %v96
    %v192 = vpop.f32.mrb[0].mxu0
    %v193 = vadd.f32 0.0, %v192
    %v194 = vpop.f32.mrb[0].mxu0
    %v195 = vpop.f32.mrb[0].mxu0
    %v196 = vadd.f32 0.0, %v195
    %v197 = vpop.f32.mrb[0].mxu0
    %198 = vmatprep.mubr.bf16.mxu0 0
    %199 = vmatmul.mubr.bf16.gmra.mrb[0].mxu0 %v99
    %v200 = vpop.f32.mrb[0].mxu0
    %v201 = vadd.f32 0.0, %v200
    %v202 = vpop.f32.mrb[0].mxu0
    %v203 = vpop.f32.mrb[0].mxu0
    %v204 = vadd.f32 0.0, %v203
    %v205 = vpop.f32.mrb[0].mxu0
    %206 = vmatprep.mubr.bf16.mxu0 0
    %207 = vmatmul.mubr.bf16.gmra.mrb[0].mxu0 %v102
    %v208 = vpop.f32.mrb[0].mxu0
    %v209 = vadd.f32 0.0, %v208
    %v210 = vpop.f32.mrb[0].mxu0
    %v211 = vpop.f32.mrb[0].mxu0
    %v212 = vadd.f32 0.0, %v211
    %v213 = vpop.f32.mrb[0].mxu0
    %214 = vmatprep.mubr.bf16.mxu0 0
    %215 = vmatmul.mubr.bf16.gmra.mrb[0].mxu0 %v105
    %v216 = vpop.f32.mrb[0].mxu0
    %v217 = vadd.f32 0.0, %v216
    %v218 = vpop.f32.mrb[0].mxu0
    %v219 = vpop.f32.mrb[0].mxu0
    %v220 = vadd.f32 0.0, %v219
    %v221 = vpop.f32.mrb[0].mxu0
    %222 = vmatprep.mubr.bf16.mxu0 0
    %223 = vmatmul.mubr.bf16.gmra.mrb[0].mxu0 %v108
    %v224 = vpop.f32.mrb[0].mxu0
    %v225 = vadd.f32 0.0, %v224
    %v226 = vpop.f32.mrb[0].mxu0
    %v227 = vpop.f32.mrb[0].mxu0
    %v228 = vadd.f32 0.0, %v227
    %v229 = vpop.f32.mrb[0].mxu0
    %230 = vmatprep.mubr.bf16.mxu0 0
    %231 = vmatmul.mubr.bf16.gmra.mrb[0].mxu0 %v111
    %v232 = vpop.f32.mrb[0].mxu0
    %v233 = vadd.f32 0.0, %v232
    %v234 = vpop.f32.mrb[0].mxu0
    %v235 = vpop.f32.mrb[0].mxu0
    %v236 = vadd.f32 0.0, %v235
    %v237 = vpop.f32.mrb[0].mxu0
    %238 = vmatprep.mubr.bf16.mxu0 0
    %239 = vmatmul.mubr.bf16.gmra.mrb[0].mxu0 %v114
    %v240 = vpop.f32.mrb[0].mxu0
    %v241 = vadd.f32 0.0, %v240
    %v242 = vpop.f32.mrb[0].mxu0
    %v243 = vpop.f32.mrb[0].mxu0
    %v244 = vadd.f32 0.0, %v243
    %v245 = vpop.f32.mrb[0].mxu0
    %246 = vmatprep.mubr.bf16.mxu0 0
    %247 = vmatmul.mubr.bf16.gmra.mrb[0].mxu0 %v117
    %v248 = vpop.f32.mrb[0].mxu0
    %v249 = vadd.f32 0.0, %v248
    %v250 = vpop.f32.mrb[0].mxu0
    %v251 = vpop.f32.mrb[0].mxu0
    %v252 = vadd.f32 0.0, %v251
    %v253 = vpop.f32.mrb[0].mxu0
    %254 = vmatprep.mubr.bf16.mxu0 0
    %255 = vmatmul.mubr.bf16.gmra.mrb[0].mxu0 %v120
    %v256 = vpop.f32.mrb[0].mxu0
    %v257 = vadd.f32 0.0, %v256
    %v258 = vpop.f32.mrb[0].mxu0
    %v259 = vpop.f32.mrb[0].mxu0
    %v260 = vadd.f32 0.0, %v259
    %v261 = vpop.f32.mrb[0].mxu0
    %262 = vmatprep.mubr.bf16.mxu0 0
    %263 = vmatmul.mubr.bf16.gmra.mrb[0].mxu0 %v123
    %v264 = vpop.f32.mrb[0].mxu0
    %v265 = vadd.f32 0.0, %v264
    %v266 = vpop.f32.mrb[0].mxu0
    %v267 = vpop.f32.mrb[0].mxu0
    %v268 = vadd.f32 0.0, %v267
    %v269 = vpop.f32.mrb[0].mxu0
    %270 = vmatprep.mubr.bf16.mxu0 0
    %271 = vmatmul.mubr.bf16.gmra.mrb[0].mxu0 %v126
    %v272 = vpop.f32.mrb[0].mxu0
    %v273 = vadd.f32 0.0, %v272
    %v274 = vpop.f32.mrb[0].mxu0
    %v275 = vpop.f32.mrb[0].mxu0
    %v276 = vadd.f32 0.0, %v275
    %v277 = vpop.f32.mrb[0].mxu0
    %278 = vmatprep.mubr.bf16.mxu0 0
    %279 = vmatmul.mubr.bf16.gmra.mrb[0].mxu0 %v129
    %v280 = vpop.f32.mrb[0].mxu0
    %v281 = vadd.f32 0.0, %v280
    %v282 = vpop.f32.mrb[0].mxu0
    %v283 = vpop.f32.mrb[0].mxu0
    %v284 = vadd.f32 0.0, %v283
    %v285 = vpop.f32.mrb[0].mxu0
    %286 = vmatprep.mubr.bf16.mxu0 0
    %287 = vmatmul.mubr.bf16.gmra.mrb[0].mxu0 %v132
    %v288 = vpop.f32.mrb[0].mxu0
    %v289 = vadd.f32 0.0, %v288
    %v290 = vpop.f32.mrb[0].mxu0
    %v291 = vpop.f32.mrb[0].mxu0
    %v292 = vadd.f32 0.0, %v291
    %v293 = vpop.f32.mrb[0].mxu0
    %294 = vdwg.mxu0
    %295 = vst [vmem:[#allocation2] sm:$0xff] %v169
    %296 = vst [vmem:[#allocation2 + $0x8] sm:$0xff] %v172
    %297 = vst [vmem:[#allocation2 + $0x10] sm:$0xff] %v177
    %298 = vst [vmem:[#allocation2 + $0x18] sm:$0xff] %v180
    %299 = vst [vmem:[#allocation2 + $0x20] sm:$0xff] %v185
    %300 = vst [vmem:[#allocation2 + $0x28] sm:$0xff] %v188
    %301 = vst [vmem:[#allocation2 + $0x30] sm:$0xff] %v193
    %302 = vst [vmem:[#allocation2 + $0x38] sm:$0xff] %v196
    %303 = vst [vmem:[#allocation2 + $0x40] sm:$0xff] %v201
    %304 = vst [vmem:[#allocation2 + $0x48] sm:$0xff] %v204
    %305 = vst [vmem:[#allocation2 + $0x50] sm:$0xff] %v209
    %306 = vst [vmem:[#allocation2 + $0x58] sm:$0xff] %v212
    %307 = vst [vmem:[#allocation2 + $0x60] sm:$0xff] %v217
    %308 = vst [vmem:[#allocation2 + $0x68] sm:$0xff] %v220
    %309 = vst [vmem:[#allocation2 + $0x70] sm:$0xff] %v225
    %310 = vst [vmem:[#allocation2 + $0x78] sm:$0xff] %v228
    %311 = vst [vmem:[#allocation2 + $0x80] sm:$0xff] %v233
    %312 = vst [vmem:[#allocation2 + $0x88] sm:$0xff] %v236
    %313 = vst [vmem:[#allocation2 + $0x90] sm:$0xff] %v241
    %314 = vst [vmem:[#allocation2 + $0x98] sm:$0xff] %v244
    %315 = vst [vmem:[#allocation2 + $0xa0] sm:$0xff] %v249
    %316 = vst [vmem:[#allocation2 + $0xa8] sm:$0xff] %v252
    %317 = vst [vmem:[#allocation2 + $0xb0] sm:$0xff] %v257
    %318 = vst [vmem:[#allocation2 + $0xb8] sm:$0xff] %v260
    %319 = vst [vmem:[#allocation2 + $0xc0] sm:$0xff] %v265
    %320 = vst [vmem:[#allocation2 + $0xc8] sm:$0xff] %v268
    %321 = vst [vmem:[#allocation2 + $0xd0] sm:$0xff] %v273
    %322 = vst [vmem:[#allocation2 + $0xd8] sm:$0xff] %v276
    %323 = vst [vmem:[#allocation2 + $0xe0] sm:$0xff] %v281
    %324 = vst [vmem:[#allocation2 + $0xe8] sm:$0xff] %v284
    %325 = vst [vmem:[#allocation2 + $0xf0] sm:$0xff] %v289
    %326 = vst [vmem:[#allocation2 + $0xf8] sm:$0xff] %v292
    // Predicated region
    $region10: #{tpu_custom_call.1} parent=1 // pred_check
      _
    $region11: #{tpu_custom_call.1} parent=1 // pred_check_branch
      %328 = sbr.rel (0) target = $region13
    $region12: #{tpu_custom_call.1} parent=1 // pred_region
      %s330 = ssub.s32 4096, 4096
      %331 = vsyncadd [#allocation3], %s330
      %s332 = sshll.u32 [#allocation2], 4
      %s333 = int_to_ptr.vmem [resolvable:$true] %s332
      %338 = dma.vmem_to_hbm [thread:$0]  %s333, 4096, %s2, [#allocation3], 128, 128, 8
    $region13: #{tpu_custom_call.1} parent=1 // pred_fallthru
      _
    // Predicated region
    $region14: #{tpu_custom_call.1} parent=1 // pred_check
      _
    $region15: #{tpu_custom_call.1} parent=1 // pred_check_branch
      %340 = sbr.rel (0) target = $region17
    $region16: #{tpu_custom_call.1} parent=1 // pred_region
      %341 = dma.done [#allocation3], 4096
    $region17: #{tpu_custom_call.1} parent=1 // pred_fallthru
      _
    %342 = vsyncpa [#allocation3], 1

</llo_original>
